<compile_context>
chip_gen: v6e
topology: v6e:2x2x1
jax: 0.10.0
libtpu: 0.0.40
codegen_flags: <defaults>
</compile_context>

<pallas_src>
import jax
import jax.numpy as jnp
from jax import lax
from jax.experimental import pallas as pl
from jax.experimental.pallas import tpu as pltpu

# Contract the last dim of both operands: A @ B^T without materializing B^T.
_NT = (((1,), (1,)), ((), ()))


def _attention_kernel(x_ref, y_ref, wq_ref, bq_ref, wk_ref, bk_ref, out_ref):
    # Q = x @ Wq^T + bq   (PyTorch-layout weight, NT contraction -> lane 0)
    q = lax.dot_general(x_ref[...], wq_ref[...], _NT,
                        preferred_element_type=jnp.float32) + bq_ref[...]
    # K = y @ Wk^T + bk
    k = lax.dot_general(y_ref[...], wk_ref[...], _NT,
                        preferred_element_type=jnp.float32) + bk_ref[...]
    # attention = sigmoid(Q @ K^T), NT contraction (no in-kernel transpose).
    att = lax.dot_general(q, k, _NT, preferred_element_type=jnp.float32)
    out_ref[...] = jax.nn.sigmoid(att)


def prepare_attention_params(wq, bq, wk, bk):
    """One-time setup (NOT per forward call): keep weights in PyTorch
    (out_dim, in_dim) layout, reshape biases to (1, out_dim) rows so the
    kernel adds them with a plain broadcast."""
    return (jnp.asarray(wq, jnp.float32),
            jnp.asarray(bq, jnp.float32).reshape(1, -1),
            jnp.asarray(wk, jnp.float32),
            jnp.asarray(bk, jnp.float32).reshape(1, -1))


def attention_forward(x, y, wq, bq_row, wk, bk_row):
    """x: (Bx, in_dim) f32, y: (By, in_dim) f32,
    (wq, bq_row, wk, bk_row) from prepare_attention_params.
    Returns sigmoid((x @ Wq^T + bq) @ (y @ Wk^T + bk)^T): (Bx, By) f32."""
    Bx, in_dim = x.shape
    By = y.shape[0]
    out_dim = wq.shape[0]

    flops = (2 * Bx * out_dim * in_dim        # Q projection
             + 2 * By * out_dim * in_dim      # K projection
             + 2 * Bx * By * out_dim)         # Q @ K^T
    bytes_accessed = 4 * (x.size + y.size + wq.size + wk.size
                          + bq_row.size + bk_row.size + Bx * By)

    vmem = pl.BlockSpec(memory_space=pltpu.MemorySpace.VMEM)
    return pl.pallas_call(
        _attention_kernel,
        out_shape=jax.ShapeDtypeStruct((Bx, By), jnp.float32),
        in_specs=[vmem, vmem, vmem, vmem, vmem, vmem],
        out_specs=vmem,
        cost_estimate=pl.CostEstimate(flops=flops,
                                      transcendentals=Bx * By,
                                      bytes_accessed=bytes_accessed),
    )(x, y, wq, bq_row, wk, bk_row)


def _reference(x, y, wq, bq, wk, bk):
    q = x @ wq.T + bq
    k = y @ wk.T + bk
    return jax.nn.sigmoid(q @ k.T)


if __name__ == "__main__":
    key = jax.random.PRNGKey(0)
    in_dim, out_dim = 20, 20
    Bx, By = 8, 8

    kx, ky, kwq, kbq, kwk, kbk = jax.random.split(key, 6)
    x = jax.random.normal(kx, (Bx, in_dim), jnp.float32)
    y = jax.random.normal(ky, (By, in_dim), jnp.float32)

    # PyTorch nn.Linear-style parameters: weight (out_dim, in_dim), bias (out_dim,)
    bound = 1.0 / (in_dim ** 0.5)
    wq = jax.random.uniform(kwq, (out_dim, in_dim), jnp.float32, -bound, bound)
    bq = jax.random.uniform(kbq, (out_dim,), jnp.float32, -bound, bound)
    wk = jax.random.uniform(kwk, (out_dim, in_dim), jnp.float32, -bound, bound)
    bk = jax.random.uniform(kbk, (out_dim,), jnp.float32, -bound, bound)

    # Setup-time parameter prep (cached on the module in real use).
    wq_p, bq_p, wk_p, bk_p = prepare_attention_params(wq, bq, wk, bk)

    out = attention_forward(x, y, wq_p, bq_p, wk_p, bk_p)
    jax.block_until_ready(out)

    ref = _reference(x, y, wq, bq, wk, bk)
    assert out.shape == (Bx, By), out.shape
    assert jnp.allclose(out, ref, atol=1e-5, rtol=1e-5), "mismatch vs reference"

    print("KERNEL_OK")
</pallas_src>

<mosaic_0001>
module attributes {stable_mosaic.version = 11 : i64} {
  func.func @_attention_kernel(%arg0: memref<8x20xf32, #tpu.memory_space<vmem>>, %arg1: memref<8x20xf32, #tpu.memory_space<vmem>>, %arg2: memref<20x20xf32, #tpu.memory_space<vmem>>, %arg3: memref<1x20xf32, #tpu.memory_space<vmem>>, %arg4: memref<20x20xf32, #tpu.memory_space<vmem>>, %arg5: memref<1x20xf32, #tpu.memory_space<vmem>>, %arg6: memref<8x8xf32, #tpu.memory_space<vmem>>) attributes {dimension_semantics = [], scalar_prefetch = 0 : i64, scratch_operands = 0 : i64, tpu.core_type = #tpu.core_type<tc>} {
    %c0 = arith.constant 0 : index
    %c0_0 = arith.constant 0 : index
    %0 = vector.load %arg0[%c0, %c0_0] : memref<8x20xf32, #tpu.memory_space<vmem>>, vector<8x20xf32>
    %c0_1 = arith.constant 0 : index
    %c0_2 = arith.constant 0 : index
    %1 = vector.load %arg2[%c0_1, %c0_2] : memref<20x20xf32, #tpu.memory_space<vmem>>, vector<20x20xf32>
    %cst = arith.constant dense<0.000000e+00> : vector<8x20xf32>
    %2 = tpu.matmul %0, %1, %cst {dimension_numbers = #tpu.dot_dimension_numbers<[1], [1], [0], [0], [0, 0, 1, 0], [], []>} : vector<8x20xf32>, vector<20x20xf32>, vector<8x20xf32> -> vector<8x20xf32>
    %c0_3 = arith.constant 0 : index
    %c0_4 = arith.constant 0 : index
    %3 = vector.load %arg3[%c0_3, %c0_4] : memref<1x20xf32, #tpu.memory_space<vmem>>, vector<1x20xf32>
    %4 = vector.broadcast %3 : vector<1x20xf32> to vector<8x20xf32>
    %5 = arith.addf %2, %4 : vector<8x20xf32>
    %c0_5 = arith.constant 0 : index
    %c0_6 = arith.constant 0 : index
    %6 = vector.load %arg1[%c0_5, %c0_6] : memref<8x20xf32, #tpu.memory_space<vmem>>, vector<8x20xf32>
    %c0_7 = arith.constant 0 : index
    %c0_8 = arith.constant 0 : index
    %7 = vector.load %arg4[%c0_7, %c0_8] : memref<20x20xf32, #tpu.memory_space<vmem>>, vector<20x20xf32>
    %cst_9 = arith.constant dense<0.000000e+00> : vector<8x20xf32>
    %8 = tpu.matmul %6, %7, %cst_9 {dimension_numbers = #tpu.dot_dimension_numbers<[1], [1], [0], [0], [0, 0, 1, 0], [], []>} : vector<8x20xf32>, vector<20x20xf32>, vector<8x20xf32> -> vector<8x20xf32>
    %c0_10 = arith.constant 0 : index
    %c0_11 = arith.constant 0 : index
    %9 = vector.load %arg5[%c0_10, %c0_11] : memref<1x20xf32, #tpu.memory_space<vmem>>, vector<1x20xf32>
    %10 = vector.broadcast %9 : vector<1x20xf32> to vector<8x20xf32>
    %11 = arith.addf %8, %10 : vector<8x20xf32>
    %cst_12 = arith.constant dense<0.000000e+00> : vector<8x8xf32>
    %12 = tpu.matmul %5, %11, %cst_12 {dimension_numbers = #tpu.dot_dimension_numbers<[1], [1], [0], [0], [0, 0, 1, 0], [], []>} : vector<8x20xf32>, vector<8x20xf32>, vector<8x8xf32> -> vector<8x8xf32>
    %13 = arith.negf %12 : vector<8x8xf32>
    %14 = math.exp %13 : vector<8x8xf32>
    %cst_13 = arith.constant 1.000000e+00 : f32
    %15 = vector.broadcast %cst_13 : f32 to vector<8x8xf32>
    %16 = arith.addf %15, %14 : vector<8x8xf32>
    %17 = arith.divf %15, %16 : vector<8x8xf32>
    %c0_14 = arith.constant 0 : index
    %c0_15 = arith.constant 0 : index
    %18 = vector.load %arg6[%c0_14, %c0_15] : memref<8x8xf32, #tpu.memory_space<vmem>>, vector<8x8xf32>
    tpu.vector_store %arg6[%c0_14, %c0_15], %17 {strides = array<i32>} : memref<8x8xf32, #tpu.memory_space<vmem>>, vector<8x8xf32>,
    return
  }
}

</mosaic_0001>

<llo_original>
// kernel: tpu_custom_call.1
$region0: #{tpu_custom_call.1}
  #allocation0 [shape = 'u32[]', space=smem, size = 0x4, offset = 0x4, fixed_abs, tag = 'smem constant byte address 0x4 - core index']
  #allocation1 [shape = 'u32[144,128]{1,0:T(1,128)}', space=vmem, size = 0x12000, scoped, tag = 'internal scratch']
  %s0 = inlined_call_operand.hbm [shape: f32[8,20], index: 0, kind: input, shape index: {}]
  %s1 = inlined_call_operand.hbm [shape: f32[8,20], index: 1, kind: input, shape index: {}]
  %s2 = inlined_call_operand.hbm [shape: f32[20,20], index: 2, kind: input, shape index: {}]
  %s3 = inlined_call_operand.vmem [shape: f32[1,20], index: 3, kind: input, shape index: {}]
  %s4 = inlined_call_operand.hbm [shape: f32[20,20], index: 4, kind: input, shape index: {}]
  %s5 = inlined_call_operand.vmem [shape: f32[1,20], index: 5, kind: input, shape index: {}]
  %s6 = inlined_call_operand.hbm [shape: f32[8,8], index: 6, kind: output, shape index: {}]
  %s7 = sld [smem:[#allocation0]]
  $region50: #{tpu_custom_call.1} parent=0
    _
  %s9 = ssub.s32 1, %s7
  %s10 = scalar_select 0, %s9, %s7
  $region1: #{tpu_custom_call.1} parent=0
    #allocation2 [shape = 'u8[4096]{0}', space=vmem, size = 0x1000, scoped, tag = 'input window, operand 0, single buffered']
    #allocation3 [shape = 's32[1]{0}', space=sflag, size = 0x4, scoped, tag = 'scoped memory for tpu_custom_call.1']
    #allocation4 [shape = 's32[1]{0}', space=sflag, size = 0x4, scoped, tag = 'scoped memory for tpu_custom_call.1']
    #allocation5 [shape = 'u8[4096]{0}', space=vmem, size = 0x1000, scoped, tag = 'input window, operand 1, single buffered']
    #allocation6 [shape = 's32[1]{0}', space=sflag, size = 0x4, scoped, tag = 'scoped memory for tpu_custom_call.1']
    #allocation7 [shape = 'u8[12288]{0}', space=vmem, size = 0x3000, scoped, tag = 'input window, operand 2, single buffered']
    #allocation8 [shape = 'u8[12288]{0}', space=vmem, size = 0x3000, scoped, tag = 'input window, operand 4, single buffered']
    #allocation9 [shape = 's32[1]{0}', space=sflag, size = 0x4, scoped, tag = 'scoped memory for tpu_custom_call.1']
    #allocation10 [shape = 'u8[4096]{0}', space=vmem, size = 0x1000, scoped, tag = 'output window, operand 0, single buffered']
    %11 = vsyncpa [#allocation3], 0
    %12 = vsyncpa [#allocation6], 0
    %13 = vsyncpa [#allocation9], 0
    %14 = vsyncpa [#allocation4], 0
    // Predicated region
    $region2: #{tpu_custom_call.1} parent=1 // pred_check
      _
    $region3: #{tpu_custom_call.1} parent=1 // pred_check_branch
      %16 = sbr.rel (0) target = $region5
    $region4: #{tpu_custom_call.1} parent=1 // pred_region
      %s18 = ssub.s32 128, 128
      %19 = vsyncadd [#allocation3], %s18
      %s21 = sshll.u32 [#allocation2], 4
      %s22 = int_to_ptr.vmem [resolvable:$true] %s21
      %24 = dma.hbm_to_vmem [thread:$0]  %s0, 128, %s22, [#allocation3]
    $region5: #{tpu_custom_call.1} parent=1 // pred_fallthru
      _
    // Predicated region
    $region6: #{tpu_custom_call.1} parent=1 // pred_check
      _
    $region7: #{tpu_custom_call.1} parent=1 // pred_check_branch
      %26 = sbr.rel (0) target = $region9
    $region8: #{tpu_custom_call.1} parent=1 // pred_region
      %s28 = ssub.s32 128, 128
      %29 = vsyncadd [#allocation6], %s28
      %s31 = sshll.u32 [#allocation5], 4
      %s32 = int_to_ptr.vmem [resolvable:$true] %s31
      %34 = dma.hbm_to_vmem [thread:$0]  %s1, 128, %s32, [#allocation6]
    $region9: #{tpu_custom_call.1} parent=1 // pred_fallthru
      _
    // Predicated region
    $region10: #{tpu_custom_call.1} parent=1 // pred_check
      _
    $region11: #{tpu_custom_call.1} parent=1 // pred_check_branch
      %36 = sbr.rel (0) target = $region13
    $region12: #{tpu_custom_call.1} parent=1 // pred_region
      %s38 = ssub.s32 384, 384
      %39 = vsyncadd [#allocation6], %s38
      %s40 = sshll.u32 [#allocation7], 4
      %s41 = int_to_ptr.vmem [resolvable:$true] %s40
      %46 = dma.hbm_to_vmem [thread:$0]  %s2, 384, %s41, [#allocation6], 128, 128, 8
    $region13: #{tpu_custom_call.1} parent=1 // pred_fallthru
      _
    // Predicated region
    $region14: #{tpu_custom_call.1} parent=1 // pred_check
      _
    $region15: #{tpu_custom_call.1} parent=1 // pred_check_branch
      %48 = sbr.rel (0) target = $region17
    $region16: #{tpu_custom_call.1} parent=1 // pred_region
      _
    $region17: #{tpu_custom_call.1} parent=1 // pred_fallthru
      _
    // Predicated region
    $region18: #{tpu_custom_call.1} parent=1 // pred_check
      _
    $region19: #{tpu_custom_call.1} parent=1 // pred_check_branch
      %50 = sbr.rel (0) target = $region21
    $region20: #{tpu_custom_call.1} parent=1 // pred_region
      %s52 = ssub.s32 384, 384
      %53 = vsyncadd [#allocation9], %s52
      %s54 = sshll.u32 [#allocation8], 4
      %s55 = int_to_ptr.vmem [resolvable:$true] %s54
      %60 = dma.hbm_to_vmem [thread:$0]  %s4, 384, %s55, [#allocation9], 128, 128, 8
    $region21: #{tpu_custom_call.1} parent=1 // pred_fallthru
      _
    // Predicated region
    $region22: #{tpu_custom_call.1} parent=1 // pred_check
      _
    $region23: #{tpu_custom_call.1} parent=1 // pred_check_branch
      %62 = sbr.rel (0) target = $region25
    $region24: #{tpu_custom_call.1} parent=1 // pred_region
      _
    $region25: #{tpu_custom_call.1} parent=1 // pred_fallthru
      _
    // Predicated region
    $region26: #{tpu_custom_call.1} parent=1 // pred_check
      _
    $region27: #{tpu_custom_call.1} parent=1 // pred_check_branch
      %64 = sbr.rel (0) target = $region29
    $region28: #{tpu_custom_call.1} parent=1 // pred_region
      %65 = dma.done [#allocation3], 128
    $region29: #{tpu_custom_call.1} parent=1 // pred_fallthru
      _
    // Predicated region
    $region30: #{tpu_custom_call.1} parent=1 // pred_check
      _
    $region31: #{tpu_custom_call.1} parent=1 // pred_check_branch
      %67 = sbr.rel (0) target = $region33
    $region32: #{tpu_custom_call.1} parent=1 // pred_region
      %68 = dma.done [#allocation6], 128
    $region33: #{tpu_custom_call.1} parent=1 // pred_fallthru
      _
    // Predicated region
    $region34: #{tpu_custom_call.1} parent=1 // pred_check
      _
    $region35: #{tpu_custom_call.1} parent=1 // pred_check_branch
      %70 = sbr.rel (0) target = $region37
    $region36: #{tpu_custom_call.1} parent=1 // pred_region
      %71 = dma.done [#allocation6], 384
    $region37: #{tpu_custom_call.1} parent=1 // pred_fallthru
      _
    // Predicated region
    $region38: #{tpu_custom_call.1} parent=1 // pred_check
      _
    $region39: #{tpu_custom_call.1} parent=1 // pred_check_branch
      %73 = sbr.rel (0) target = $region41
    $region40: #{tpu_custom_call.1} parent=1 // pred_region
      %74 = dma.done [#allocation9], 384
    $region41: #{tpu_custom_call.1} parent=1 // pred_fallthru
      _
    %v75 = vld [vmem:[#allocation2] sm:$0xff]
    %v76 = vld [vmem:[#allocation7] sm:$0xff]
    %v77 = vld [vmem:[#allocation7 + $0x8] sm:$0xff]
    %v78 = vld [vmem:[#allocation7 + $0x10] sm:$0xf]
    %v79 = vld [vmem:[%s3] sm:$0x1]
    %v81 = vlaneseq
    %v82 = vshrl.u32 %v81, 7
    %v83 = vsub.s32 0, %v82
    %v84 = vrot.slane %v79, %v83
    %vm86 = vcmask 162816
    %v88 = vsel %vm86, %v75, 0
    %v91 = vsel %vm86, %v76, 0
    %v94 = vsel %vm86, %v77, 0
    %v97 = vsel %vm86, %v78, 0
    %99 = vmatprep.subr.mxu0 0.0
    %100 = vmatpush1.xpose.msra.mxu0 0.0
    %101 = vmatprep.subr.mxu0 0.0
    %102 = vmatpush1.xpose.msra.mxu0 0.0
    %103 = vmatprep.subr.mxu0 0.0
    %104 = vmatpush1.xpose.msra.mxu0 0.0
    %105 = vmatprep.subr.mxu0 0.0
    %106 = vmatpush1.xpose.msra.mxu0 0.0
    %107 = vmatprep.subr.mxu0 0.0
    %108 = vmatpush1.xpose.msra.mxu0 0.0
    %109 = vmatprep.subr.mxu0 0.0
    %110 = vmatpush1.xpose.msra.mxu0 0.0
    %111 = vmatprep.subr.mxu0 0.0
    %112 = vmatpush1.xpose.msra.mxu0 0.0
    %113 = vmatprep.subr.mxu0 0.0
    %114 = vmatpush1.xpose.msra.mxu0 0.0
    %115 = vmatprep.subr.mxu0 0.0
    %116 = vmatpush1.xpose.msra.mxu0 0.0
    %117 = vmatprep.subr.mxu0 0.0
    %118 = vmatpush1.xpose.msra.mxu0 0.0
    %119 = vmatprep.subr.mxu0 0.0
    %120 = vmatpush1.xpose.msra.mxu0 0.0
    %121 = vmatprep.subr.mxu0 0.0
    %122 = vmatpush1.xpose.msra.mxu0 0.0
    %123 = vmatprep.subr.mxu0 0.0
    %124 = vmatpush1.xpose.msra.mxu0 0.0
    %125 = vmatprep.subr.mxu0 0.0
    %126 = vmatpush1.xpose.msra.mxu0 %v97
    %127 = vmatprep.subr.mxu0 0.0
    %128 = vmatpush1.xpose.msra.mxu0 %v94
    %129 = vmatprep.subr.mxu0 0.0
    %130 = vmatpush1.xpose.msra.mxu0 %v91
    %131 = vmatprep.subr.mxu0 0.0
    %132 = vmatpush2.xpose.msra.mxu0 0.0
    %133 = vmatprep.subr.mxu0 0.0
    %134 = vmatpush2.xpose.msra.mxu0 0.0
    %135 = vmatprep.subr.mxu0 0.0
    %136 = vmatpush2.xpose.msra.mxu0 0.0
    %137 = vmatprep.subr.mxu0 0.0
    %138 = vmatpush2.xpose.msra.mxu0 0.0
    %139 = vmatprep.subr.mxu0 0.0
    %140 = vmatpush2.xpose.msra.mxu0 0.0
    %141 = vmatprep.subr.mxu0 0.0
    %142 = vmatpush2.xpose.msra.mxu0 0.0
    %143 = vmatprep.subr.mxu0 0.0
    %144 = vmatpush2.xpose.msra.mxu0 0.0
    %145 = vmatprep.subr.mxu0 0.0
    %146 = vmatpush2.xpose.msra.mxu0 0.0
    %147 = vmatprep.subr.mxu0 0.0
    %148 = vmatpush2.xpose.msra.mxu0 0.0
    %149 = vmatprep.subr.mxu0 0.0
    %150 = vmatpush2.xpose.msra.mxu0 0.0
    %151 = vmatprep.subr.mxu0 0.0
    %152 = vmatpush2.xpose.msra.mxu0 0.0
    %153 = vmatprep.subr.mxu0 0.0
    %154 = vmatpush2.xpose.msra.mxu0 0.0
    %155 = vmatprep.subr.mxu0 0.0
    %156 = vmatpush2.xpose.msra.mxu0 0.0
    %157 = vmatprep.subr.mxu0 0.0
    %158 = vmatpush2.xpose.msra.mxu0 0.0
    %159 = vmatprep.subr.mxu0 0.0
    %160 = vmatpush2.xpose.msra.mxu0 0.0
    %161 = vmatprep.subr.mxu0 0.0
    %162 = vmatpush2.xpose.msra.mxu0 0.0
    %163 = vmatprep.mubr.f32.mxu0 0.0
    %164 = vmatmul.mubr.f32.gmra.mxu0 %v88
    %v165 = vpop.f32.mrf.mxu0
    %v166 = vadd.f32 %v84, %v165
    %v167 = vpop.f32.mrf.mxu0
    %168 = vdwg.mxu0
    %v169 = vld [vmem:[#allocation5] sm:$0xff]
    %v170 = vld [vmem:[#allocation8] sm:$0xff]
    %v171 = vld [vmem:[#allocation8 + $0x8] sm:$0xff]
    %v172 = vld [vmem:[#allocation8 + $0x10] sm:$0xf]
    %v173 = vld [vmem:[%s5] sm:$0x1]
    %v175 = vlaneseq
    %v176 = vshrl.u32 %v175, 7
    %v177 = vsub.s32 0, %v176
    %v178 = vrot.slane %v173, %v177
    %v181 = vsel %vm86, %v169, 0
    %v184 = vsel %vm86, %v170, 0
    %v187 = vsel %vm86, %v171, 0
    %v190 = vsel %vm86, %v172, 0
    %192 = vmatprep.subr.mxu0 0.0
    %193 = vmatpush1.xpose.msra.mxu0 0.0
    %194 = vmatprep.subr.mxu0 0.0
    %195 = vmatpush1.xpose.msra.mxu0 0.0
    %196 = vmatprep.subr.mxu0 0.0
    %197 = vmatpush1.xpose.msra.mxu0 0.0
    %198 = vmatprep.subr.mxu0 0.0
    %199 = vmatpush1.xpose.msra.mxu0 0.0
    %200 = vmatprep.subr.mxu0 0.0
    %201 = vmatpush1.xpose.msra.mxu0 0.0
    %202 = vmatprep.subr.mxu0 0.0
    %203 = vmatpush1.xpose.msra.mxu0 0.0
    %204 = vmatprep.subr.mxu0 0.0
    %205 = vmatpush1.xpose.msra.mxu0 0.0
    %206 = vmatprep.subr.mxu0 0.0
    %207 = vmatpush1.xpose.msra.mxu0 0.0
    %208 = vmatprep.subr.mxu0 0.0
    %209 = vmatpush1.xpose.msra.mxu0 0.0
    %210 = vmatprep.subr.mxu0 0.0
    %211 = vmatpush1.xpose.msra.mxu0 0.0
    %212 = vmatprep.subr.mxu0 0.0
    %213 = vmatpush1.xpose.msra.mxu0 0.0
    %214 = vmatprep.subr.mxu0 0.0
    %215 = vmatpush1.xpose.msra.mxu0 0.0
    %216 = vmatprep.subr.mxu0 0.0
    %217 = vmatpush1.xpose.msra.mxu0 0.0
    %218 = vmatprep.subr.mxu0 0.0
    %219 = vmatpush1.xpose.msra.mxu0 %v190
    %220 = vmatprep.subr.mxu0 0.0
    %221 = vmatpush1.xpose.msra.mxu0 %v187
    %222 = vmatprep.subr.mxu0 0.0
    %223 = vmatpush1.xpose.msra.mxu0 %v184
    %224 = vmatprep.subr.mxu0 0.0
    %225 = vmatpush2.xpose.msra.mxu0 0.0
    %226 = vmatprep.subr.mxu0 0.0
    %227 = vmatpush2.xpose.msra.mxu0 0.0
    %228 = vmatprep.subr.mxu0 0.0
    %229 = vmatpush2.xpose.msra.mxu0 0.0
    %230 = vmatprep.subr.mxu0 0.0
    %231 = vmatpush2.xpose.msra.mxu0 0.0
    %232 = vmatprep.subr.mxu0 0.0
    %233 = vmatpush2.xpose.msra.mxu0 0.0
    %234 = vmatprep.subr.mxu0 0.0
    %235 = vmatpush2.xpose.msra.mxu0 0.0
    %236 = vmatprep.subr.mxu0 0.0
    %237 = vmatpush2.xpose.msra.mxu0 0.0
    %238 = vmatprep.subr.mxu0 0.0
    %239 = vmatpush2.xpose.msra.mxu0 0.0
    %240 = vmatprep.subr.mxu0 0.0
    %241 = vmatpush2.xpose.msra.mxu0 0.0
    %242 = vmatprep.subr.mxu0 0.0
    %243 = vmatpush2.xpose.msra.mxu0 0.0
    %244 = vmatprep.subr.mxu0 0.0
    %245 = vmatpush2.xpose.msra.mxu0 0.0
    %246 = vmatprep.subr.mxu0 0.0
    %247 = vmatpush2.xpose.msra.mxu0 0.0
    %248 = vmatprep.subr.mxu0 0.0
    %249 = vmatpush2.xpose.msra.mxu0 0.0
    %250 = vmatprep.subr.mxu0 0.0
    %251 = vmatpush2.xpose.msra.mxu0 0.0
    %252 = vmatprep.subr.mxu0 0.0
    %253 = vmatpush2.xpose.msra.mxu0 0.0
    %254 = vmatprep.subr.mxu0 0.0
    %255 = vmatpush2.xpose.msra.mxu0 0.0
    %256 = vmatprep.mubr.f32.mxu0 0.0
    %257 = vmatmul.mubr.f32.gmra.mxu0 %v181
    %v258 = vpop.f32.mrf.mxu0
    %v259 = vadd.f32 %v178, %v258
    %v260 = vpop.f32.mrf.mxu0
    %261 = vdwg.mxu0
    %v263 = vsel %vm86, %v166, 0
    %v266 = vsel %vm86, %v259, 0
    %268 = vmatprep.subr.mxu0 0.0
    %269 = vmatpush1.xpose.msra.mxu0 0.0
    %270 = vmatprep.subr.mxu0 0.0
    %271 = vmatpush1.xpose.msra.mxu0 0.0
    %272 = vmatprep.subr.mxu0 0.0
    %273 = vmatpush1.xpose.msra.mxu0 0.0
    %274 = vmatprep.subr.mxu0 0.0
    %275 = vmatpush1.xpose.msra.mxu0 0.0
    %276 = vmatprep.subr.mxu0 0.0
    %277 = vmatpush1.xpose.msra.mxu0 0.0
    %278 = vmatprep.subr.mxu0 0.0
    %279 = vmatpush1.xpose.msra.mxu0 0.0
    %280 = vmatprep.subr.mxu0 0.0
    %281 = vmatpush1.xpose.msra.mxu0 0.0
    %282 = vmatprep.subr.mxu0 0.0
    %283 = vmatpush1.xpose.msra.mxu0 0.0
    %284 = vmatprep.subr.mxu0 0.0
    %285 = vmatpush1.xpose.msra.mxu0 0.0
    %286 = vmatprep.subr.mxu0 0.0
    %287 = vmatpush1.xpose.msra.mxu0 0.0
    %288 = vmatprep.subr.mxu0 0.0
    %289 = vmatpush1.xpose.msra.mxu0 0.0
    %290 = vmatprep.subr.mxu0 0.0
    %291 = vmatpush1.xpose.msra.mxu0 0.0
    %292 = vmatprep.subr.mxu0 0.0
    %293 = vmatpush1.xpose.msra.mxu0 0.0
    %294 = vmatprep.subr.mxu0 0.0
    %295 = vmatpush1.xpose.msra.mxu0 0.0
    %296 = vmatprep.subr.mxu0 0.0
    %297 = vmatpush1.xpose.msra.mxu0 0.0
    %298 = vmatprep.subr.mxu0 0.0
    %299 = vmatpush1.xpose.msra.mxu0 %v266
    %300 = vmatprep.subr.mxu0 0.0
    %301 = vmatpush2.xpose.msra.mxu0 0.0
    %302 = vmatprep.subr.mxu0 0.0
    %303 = vmatpush2.xpose.msra.mxu0 0.0
    %304 = vmatprep.subr.mxu0 0.0
    %305 = vmatpush2.xpose.msra.mxu0 0.0
    %306 = vmatprep.subr.mxu0 0.0
    %307 = vmatpush2.xpose.msra.mxu0 0.0
    %308 = vmatprep.subr.mxu0 0.0
    %309 = vmatpush2.xpose.msra.mxu0 0.0
    %310 = vmatprep.subr.mxu0 0.0
    %311 = vmatpush2.xpose.msra.mxu0 0.0
    %312 = vmatprep.subr.mxu0 0.0
    %313 = vmatpush2.xpose.msra.mxu0 0.0
    %314 = vmatprep.subr.mxu0 0.0
    %315 = vmatpush2.xpose.msra.mxu0 0.0
    %316 = vmatprep.subr.mxu0 0.0
    %317 = vmatpush2.xpose.msra.mxu0 0.0
    %318 = vmatprep.subr.mxu0 0.0
    %319 = vmatpush2.xpose.msra.mxu0 0.0
    %320 = vmatprep.subr.mxu0 0.0
    %321 = vmatpush2.xpose.msra.mxu0 0.0
    %322 = vmatprep.subr.mxu0 0.0
    %323 = vmatpush2.xpose.msra.mxu0 0.0
    %324 = vmatprep.subr.mxu0 0.0
    %325 = vmatpush2.xpose.msra.mxu0 0.0
    %326 = vmatprep.subr.mxu0 0.0
    %327 = vmatpush2.xpose.msra.mxu0 0.0
    %328 = vmatprep.subr.mxu0 0.0
    %329 = vmatpush2.xpose.msra.mxu0 0.0
    %330 = vmatprep.subr.mxu0 0.0
    %331 = vmatpush2.xpose.msra.mxu0 0.0
    %332 = vmatprep.mubr.f32.mxu0 0.0
    %333 = vmatmul.mubr.f32.gmra.mxu0 %v263
    %v334 = vpop.f32.mrf.mxu0
    %v335 = vadd.f32 0.0, %v334
    %v336 = vpop.f32.mrf.mxu0
    %337 = vdwg.mxu0
    %v338 = vxor.u32 %v335, 2147483648
    %v339 = vmul.f32 %v338, 1.442695
    %v340 = vpow.pop %v339
    %v341 = vadd.f32 %v340, 1.0
    %v342 = vrcp.pop %v341
    %v343 = vmul.f32 1.0, %v342
    %vm344 = vcmask 64512
    %345 = vst.msk [vmem:[#allocation10] sm:$0xff] %vm344, %v343
    // Predicated region
    $region42: #{tpu_custom_call.1} parent=1 // pred_check
      _
    $region43: #{tpu_custom_call.1} parent=1 // pred_check_branch
      %347 = sbr.rel (0) target = $region45
    $region44: #{tpu_custom_call.1} parent=1 // pred_region
      %s349 = ssub.s32 128, 128
      %350 = vsyncadd [#allocation4], %s349
      %s352 = sshll.u32 [#allocation10], 4
      %s353 = int_to_ptr.vmem [resolvable:$true] %s352
      %355 = dma.vmem_to_hbm [thread:$0]  %s353, 128, %s6, [#allocation4]
    $region45: #{tpu_custom_call.1} parent=1 // pred_fallthru
      _
    // Predicated region
    $region46: #{tpu_custom_call.1} parent=1 // pred_check
      _
    $region47: #{tpu_custom_call.1} parent=1 // pred_check_branch
      %357 = sbr.rel (0) target = $region49
    $region48: #{tpu_custom_call.1} parent=1 // pred_region
      %358 = dma.done [#allocation4], 128
    $region49: #{tpu_custom_call.1} parent=1 // pred_fallthru
      _
    %359 = vsyncpa [#allocation3], 1
    %360 = vsyncpa [#allocation6], 1
    %361 = vsyncpa [#allocation9], 1
    %362 = vsyncpa [#allocation4], 1

</llo_original>
